<compile_context>
chip_gen: v6e
topology: v6e:2x2x1
jax: 0.10.0
libtpu: 0.0.40
codegen_flags: <defaults>
</compile_context>

<pallas_src>
import functools

import jax
import jax.numpy as jnp
from jax.experimental import pallas as pl
from jax.experimental.pallas import tpu as pltpu

_INV_SQRT2 = 0.7071067811865475
_SQRT_2_OVER_PI = 0.7978845608028654
_GELU_TANH_C = 0.044715
_EPS = 1e-5  # nn.LayerNorm default


def _finetune_proj_kernel(x_ref, w_ref, b_ref, gamma_ref, beta_ref, o_ref, *,
                          approx_gelu):
    # --- Linear (MXU): cast the x tile in-kernel to W's dtype (bf16 full-rate
    #     path when enabled) while streaming f32 x from HBM; f32 accumulation.
    w = w_ref[...]
    proj = jnp.dot(x_ref[...].astype(w.dtype), w,
                   preferred_element_type=jnp.float32)
    proj = proj + b_ref[...]  # broadcast (1, P) over rows

    # --- GELU ---
    if approx_gelu:
        # tanh approximation: transcendental runs in the EUP slot (co-issues
        # with VPU work) instead of erf's long VALU polynomial.
        inner = _SQRT_2_OVER_PI * (proj + _GELU_TANH_C * proj * proj * proj)
        h = 0.5 * proj * (1.0 + jnp.tanh(inner))
    else:
        # exact erf GELU, matches torch.nn.GELU default numerics
        h = 0.5 * proj * (1.0 + jax.lax.erf(proj * _INV_SQRT2))

    # --- LayerNorm over last dim via raw moments: both reductions are
    #     independent (no full-tile subtract between the two XLU reductions).
    inv_p = 1.0 / h.shape[-1]
    mean = jnp.sum(h, axis=-1, keepdims=True) * inv_p
    mean_sq = jnp.sum(h * h, axis=-1, keepdims=True) * inv_p
    var = jnp.maximum(mean_sq - mean * mean, 0.0)
    inv_std = jax.lax.rsqrt(var + _EPS)
    out = (h - mean) * inv_std * gamma_ref[...] + beta_ref[...]

    o_ref[...] = out.astype(o_ref.dtype)


def _is_multi_tc_chip():
    """True on chips with >1 TensorCore per device (v7x); only then is it
    worth shrinking the row tile to create extra grid steps for core sharding."""
    try:
        kind = jax.devices()[0].device_kind.lower()
    except Exception:
        return False
    return ("v7" in kind) or ("tpu7" in kind)


def _choose_row_tile(m, tm, row_align, multi_tc):
    """Aligned, VMEM-friendly row tile. On multi-TC chips, leave >=4 grid
    steps (>=2 for tiny batches) so both TensorCores stay busy; on 1-TC chips
    keep the tile as large as the batch allows (less per-step overhead)."""
    tm = max(row_align, (tm // row_align) * row_align)
    m_aligned = pl.cdiv(m, row_align) * row_align
    tm = min(tm, m_aligned)
    if multi_tc:
        target = 4 if m_aligned >= 4 * row_align else 2
        if pl.cdiv(m_aligned, tm) < target and m_aligned >= target * row_align:
            tm = pl.cdiv(pl.cdiv(m_aligned, target), row_align) * row_align
    return tm


def finetune_projection(x, w, b, gamma, beta, *, tm=512, use_bf16_matmul=True,
                        approx_gelu=True, out_dtype=None):
    """x: [M, E]. w: [E, P]. b/gamma/beta: [P]. Returns [M, P] in out_dtype
    (defaults to x.dtype)."""
    M, E = x.shape
    P = w.shape[1]
    out_dtype = x.dtype if out_dtype is None else out_dtype

    tm_eff = _choose_row_tile(M, tm, 8, _is_multi_tc_chip())
    grid = (pl.cdiv(M, tm_eff),)  # ragged last block masked by Pallas writeback

    # Only W gets a one-time boundary cast; x streams f32 and is cast in-kernel.
    w_in = w.astype(jnp.bfloat16) if use_bf16_matmul else w
    b2 = b.reshape(1, P).astype(jnp.float32)
    g2 = gamma.reshape(1, P).astype(jnp.float32)
    be2 = beta.reshape(1, P).astype(jnp.float32)

    x_itemsize = jnp.dtype(x.dtype).itemsize
    w_itemsize = jnp.dtype(w_in.dtype).itemsize
    out_itemsize = jnp.dtype(out_dtype).itemsize
    cost = pl.CostEstimate(
        flops=2 * M * E * P,
        transcendentals=M * P + M,  # gelu per element + rsqrt per row
        bytes_accessed=(M * E * x_itemsize + E * P * w_itemsize
                        + 3 * P * 4 + M * P * out_itemsize),
    )

    # VMEM budget: x/out tiles double-buffered, constants ideally Buffered(1);
    # assume worst case (all double-buffered) plus f32-intermediate headroom.
    const_bytes = E * P * w_itemsize + 3 * P * 4
    vmem_est = (2 * tm_eff * (E * x_itemsize + P * out_itemsize)
                + 2 * tm_eff * P * 4
                + 2 * const_bytes)
    compiler_kwargs = dict(dimension_semantics=("parallel",))
    if vmem_est > (24 << 20):
        compiler_kwargs["vmem_limit_bytes"] = min(
            int(vmem_est * 1.25) + (1 << 20), 100 << 20)

    kernel = functools.partial(_finetune_proj_kernel, approx_gelu=approx_gelu)
    out_shape = jax.ShapeDtypeStruct((M, P), out_dtype)

    def _call(single_buffer_consts):
        const_kw = ({"pipeline_mode": pl.Buffered(1)}
                    if single_buffer_consts else {})
        in_specs = [
            pl.BlockSpec((tm_eff, E), lambda i: (i, 0)),          # x row tile
            pl.BlockSpec((E, P), lambda i: (0, 0), **const_kw),   # weight
            pl.BlockSpec((1, P), lambda i: (0, 0), **const_kw),   # bias
            pl.BlockSpec((1, P), lambda i: (0, 0), **const_kw),   # ln gamma
            pl.BlockSpec((1, P), lambda i: (0, 0), **const_kw),   # ln beta
        ]
        out_specs = pl.BlockSpec((tm_eff, P), lambda i: (i, 0))
        return pl.pallas_call(
            kernel,
            out_shape=out_shape,
            grid=grid,
            in_specs=in_specs,
            out_specs=out_specs,
            compiler_params=pltpu.CompilerParams(**compiler_kwargs),
            cost_estimate=cost,
        )(x, w_in, b2, g2, be2)

    try:
        return _call(True)   # constant-index operands single-buffered
    except Exception:
        return _call(False)  # fallback if Buffered(1) is rejected by lowering


def finetune_projection_ref(x, w, b, gamma, beta, *, approx_gelu=True):
    proj = x @ w + b
    if approx_gelu:
        inner = _SQRT_2_OVER_PI * (proj + _GELU_TANH_C * proj ** 3)
        h = 0.5 * proj * (1.0 + jnp.tanh(inner))
    else:
        h = 0.5 * proj * (1.0 + jax.lax.erf(proj * _INV_SQRT2))
    mean = jnp.mean(h, axis=-1, keepdims=True)
    var = jnp.mean((h - mean) ** 2, axis=-1, keepdims=True)
    return (h - mean) * jax.lax.rsqrt(var + _EPS) * gamma + beta


if __name__ == "__main__":
    # Small shapes consistent with the module's embedding path:
    # batch of row embeddings projected E=32 -> P=128.
    batch = 16
    embedding_dim = 32
    projection_dim = 128

    key = jax.random.PRNGKey(0)
    kx, kw, kb, kg, kbe = jax.random.split(key, 5)

    x = jax.random.normal(kx, (batch, embedding_dim), dtype=jnp.float32)
    # Deterministic synthetic parameters (nn.Linear-like scale).
    w = jax.random.normal(kw, (embedding_dim, projection_dim), dtype=jnp.float32)
    w = w * (1.0 / jnp.sqrt(embedding_dim))
    b = jax.random.normal(kb, (projection_dim,), dtype=jnp.float32) * 0.01
    gamma = 1.0 + 0.1 * jax.random.normal(kg, (projection_dim,), dtype=jnp.float32)
    beta = 0.1 * jax.random.normal(kbe, (projection_dim,), dtype=jnp.float32)

    # --- exact path (f32 operands, erf GELU): tight comparison vs reference ---
    ref_exact = finetune_projection_ref(x, w, b, gamma, beta, approx_gelu=False)
    out_exact = finetune_projection(x, w, b, gamma, beta,
                                    use_bf16_matmul=False, approx_gelu=False)
    out_exact = jax.block_until_ready(out_exact)
    assert out_exact.shape == (batch, projection_dim)
    assert jnp.allclose(out_exact, ref_exact, atol=1e-4, rtol=1e-4), \
        "exact path mismatch vs ref"

    # --- default fast path (bf16 MXU operands cast in-kernel, tanh GELU) ---
    ref_fast = finetune_projection_ref(x, w, b, gamma, beta, approx_gelu=True)
    out_fast = finetune_projection(x, w, b, gamma, beta)
    out_fast = jax.block_until_ready(out_fast)
    assert out_fast.shape == (batch, projection_dim)
    assert jnp.allclose(out_fast, ref_fast, atol=2e-2, rtol=2e-2), \
        "fast path mismatch vs ref"

    # --- optional bf16 output writeback (halves output HBM traffic) ---
    out_bf16 = finetune_projection(x, w, b, gamma, beta, out_dtype=jnp.bfloat16)
    out_bf16 = jax.block_until_ready(out_bf16)
    assert out_bf16.dtype == jnp.bfloat16
    assert out_bf16.shape == (batch, projection_dim)

    # --- ragged batch (not a multiple of the row tile): no wrapper pad/slice ---
    x_odd = jax.random.normal(kx, (batch + 5, embedding_dim), dtype=jnp.float32)
    ref_odd = finetune_projection_ref(x_odd, w, b, gamma, beta, approx_gelu=True)
    out_odd = jax.block_until_ready(finetune_projection(x_odd, w, b, gamma, beta))
    assert out_odd.shape == (batch + 5, projection_dim)
    assert jnp.allclose(out_odd, ref_odd, atol=2e-2, rtol=2e-2), \
        "ragged batch mismatch vs ref"

    print("KERNEL_OK")
</pallas_src>

<mosaic_0001>
module attributes {stable_mosaic.version = 11 : i64} {
  func.func @_finetune_proj_kernel(%arg0: i32, %arg1: memref<16x32xf32, #tpu.memory_space<vmem>>, %arg2: memref<32x128xf32, #tpu.memory_space<vmem>>, %arg3: memref<1x128xf32, #tpu.memory_space<vmem>>, %arg4: memref<1x128xf32, #tpu.memory_space<vmem>>, %arg5: memref<1x128xf32, #tpu.memory_space<vmem>>, %arg6: memref<16x128xf32, #tpu.memory_space<vmem>>) attributes {dimension_semantics = [#tpu.dimension_semantics<parallel>], iteration_bounds = array<i64: 1>, scalar_prefetch = 0 : i64, scratch_operands = 0 : i64, tpu.core_type = #tpu.core_type<tc>, window_params = [{transform_indices = @transform_0, window_bounds = array<i64: 16, 32>}, {pipeline_mode = #tpu.pipeline_mode<synchronous>, transform_indices = @transform_1, window_bounds = array<i64: 32, 128>}, {pipeline_mode = #tpu.pipeline_mode<synchronous>, transform_indices = @transform_2, window_bounds = array<i64: 1, 128>}, {pipeline_mode = #tpu.pipeline_mode<synchronous>, transform_indices = @transform_3, window_bounds = array<i64: 1, 128>}, {pipeline_mode = #tpu.pipeline_mode<synchronous>, transform_indices = @transform_4, window_bounds = array<i64: 1, 128>}, {transform_indices = @transform_5, window_bounds = array<i64: 16, 128>}]} {
    %c0 = arith.constant 0 : index
    %c0_0 = arith.constant 0 : index
    %0 = vector.load %arg2[%c0, %c0_0] : memref<32x128xf32, #tpu.memory_space<vmem>>, vector<32x128xf32>
    %c0_1 = arith.constant 0 : index
    %c0_2 = arith.constant 0 : index
    %1 = vector.load %arg1[%c0_1, %c0_2] : memref<16x32xf32, #tpu.memory_space<vmem>>, vector<16x32xf32>
    %cst = arith.constant dense<0.000000e+00> : vector<16x128xf32>
    %2 = tpu.matmul %1, %0, %cst {dimension_numbers = #tpu.dot_dimension_numbers<[1], [0], [0], [1], [0, 0, 1, 1], [], []>} : vector<16x32xf32>, vector<32x128xf32>, vector<16x128xf32> -> vector<16x128xf32>
    %c0_3 = arith.constant 0 : index
    %c0_4 = arith.constant 0 : index
    %3 = vector.load %arg3[%c0_3, %c0_4] : memref<1x128xf32, #tpu.memory_space<vmem>>, vector<1x128xf32>
    %4 = vector.broadcast %3 : vector<1x128xf32> to vector<16x128xf32>
    %5 = arith.addf %2, %4 : vector<16x128xf32>
    %cst_5 = arith.constant 5.000000e-01 : f32
    %6 = vector.broadcast %cst_5 : f32 to vector<16x128xf32>
    %7 = arith.mulf %6, %5 : vector<16x128xf32>
    %cst_6 = arith.constant 0.707106769 : f32
    %8 = vector.broadcast %cst_6 : f32 to vector<16x128xf32>
    %9 = arith.mulf %5, %8 : vector<16x128xf32>
    %10 = math.erf %9 : vector<16x128xf32>
    %cst_7 = arith.constant 1.000000e+00 : f32
    %11 = vector.broadcast %cst_7 : f32 to vector<16x128xf32>
    %12 = arith.addf %11, %10 : vector<16x128xf32>
    %13 = arith.mulf %7, %12 : vector<16x128xf32>
    %cst_8 = arith.constant dense<0.000000e+00> : vector<16xf32>
    %14 = vector.multi_reduction <add>, %13, %cst_8 [1] : vector<16x128xf32> to vector<16xf32>
    %15 = vector.shape_cast %14 : vector<16xf32> to vector<16x1xf32>
    %cst_9 = arith.constant 7.812500e-03 : f32
    %16 = vector.broadcast %cst_9 : f32 to vector<16x1xf32>
    %17 = arith.mulf %15, %16 : vector<16x1xf32>
    %18 = arith.mulf %13, %13 : vector<16x128xf32>
    %cst_10 = arith.constant dense<0.000000e+00> : vector<16xf32>
    %19 = vector.multi_reduction <add>, %18, %cst_10 [1] : vector<16x128xf32> to vector<16xf32>
    %20 = vector.shape_cast %19 : vector<16xf32> to vector<16x1xf32>
    %cst_11 = arith.constant 7.812500e-03 : f32
    %21 = vector.broadcast %cst_11 : f32 to vector<16x1xf32>
    %22 = arith.mulf %20, %21 : vector<16x1xf32>
    %23 = arith.mulf %17, %17 : vector<16x1xf32>
    %24 = arith.subf %22, %23 : vector<16x1xf32>
    %cst_12 = arith.constant 0.000000e+00 : f32
    %25 = vector.broadcast %cst_12 : f32 to vector<16x1xf32>
    %26 = arith.maximumf %24, %25 : vector<16x1xf32>
    %cst_13 = arith.constant 9.99999974E-6 : f32
    %27 = vector.broadcast %cst_13 : f32 to vector<16x1xf32>
    %28 = arith.addf %26, %27 : vector<16x1xf32>
    %29 = math.rsqrt %28 : vector<16x1xf32>
    %30 = vector.broadcast %17 : vector<16x1xf32> to vector<16x128xf32>
    %31 = arith.subf %13, %30 : vector<16x128xf32>
    %32 = vector.broadcast %29 : vector<16x1xf32> to vector<16x128xf32>
    %33 = arith.mulf %31, %32 : vector<16x128xf32>
    %c0_14 = arith.constant 0 : index
    %c0_15 = arith.constant 0 : index
    %34 = vector.load %arg4[%c0_14, %c0_15] : memref<1x128xf32, #tpu.memory_space<vmem>>, vector<1x128xf32>
    %35 = vector.broadcast %34 : vector<1x128xf32> to vector<16x128xf32>
    %36 = arith.mulf %33, %35 : vector<16x128xf32>
    %c0_16 = arith.constant 0 : index
    %c0_17 = arith.constant 0 : index
    %37 = vector.load %arg5[%c0_16, %c0_17] : memref<1x128xf32, #tpu.memory_space<vmem>>, vector<1x128xf32>
    %38 = vector.broadcast %37 : vector<1x128xf32> to vector<16x128xf32>
    %39 = arith.addf %36, %38 : vector<16x128xf32>
    %c0_18 = arith.constant 0 : index
    %c0_19 = arith.constant 0 : index
    %40 = vector.load %arg6[%c0_18, %c0_19] : memref<16x128xf32, #tpu.memory_space<vmem>>, vector<16x128xf32>
    tpu.vector_store %arg6[%c0_18, %c0_19], %39 {strides = array<i32>} : memref<16x128xf32, #tpu.memory_space<vmem>>, vector<16x128xf32>,
    return
  }
  func.func @transform_0(%arg0: i32) -> (i32, i32) {
    %c0_i32 = arith.constant 0 : i32
    %c0_i32_0 = arith.constant 0 : i32
    return %arg0, %c0_i32 : i32, i32
  }
  func.func @transform_1(%arg0: i32) -> (i32, i32) {
    %c0_i32 = arith.constant 0 : i32
    %c0_i32_0 = arith.constant 0 : i32
    %c0_i32_1 = arith.constant 0 : i32
    return %c0_i32, %c0_i32_0 : i32, i32
  }
  func.func @transform_2(%arg0: i32) -> (i32, i32) {
    %c0_i32 = arith.constant 0 : i32
    %c0_i32_0 = arith.constant 0 : i32
    %c0_i32_1 = arith.constant 0 : i32
    return %c0_i32, %c0_i32_0 : i32, i32
  }
  func.func @transform_3(%arg0: i32) -> (i32, i32) {
    %c0_i32 = arith.constant 0 : i32
    %c0_i32_0 = arith.constant 0 : i32
    %c0_i32_1 = arith.constant 0 : i32
    return %c0_i32, %c0_i32_0 : i32, i32
  }
  func.func @transform_4(%arg0: i32) -> (i32, i32) {
    %c0_i32 = arith.constant 0 : i32
    %c0_i32_0 = arith.constant 0 : i32
    %c0_i32_1 = arith.constant 0 : i32
    return %c0_i32, %c0_i32_0 : i32, i32
  }
  func.func @transform_5(%arg0: i32) -> (i32, i32) {
    %c0_i32 = arith.constant 0 : i32
    %c0_i32_0 = arith.constant 0 : i32
    return %arg0, %c0_i32 : i32, i32
  }
}

module attributes {stable_mosaic.version = 11 : i64} {
  func.func @_finetune_proj_kernel(%arg0: i32, %arg1: memref<16x32xf32, #tpu.memory_space<vmem>>, %arg2: memref<32x128xf32, #tpu.memory_space<vmem>>, %arg3: memref<1x128xf32, #tpu.memory_space<vmem>>, %arg4: memref<1x128xf32, #tpu.memory_space<vmem>>, %arg5: memref<1x128xf32, #tpu.memory_space<vmem>>, %arg6: memref<16x128xf32, #tpu.memory_space<vmem>>) attributes {dimension_semantics = [#tpu.dimension_semantics<parallel>], iteration_bounds = array<i64: 1>, scalar_prefetch = 0 : i64, scratch_operands = 0 : i64, tpu.core_type = #tpu.core_type<tc>, window_params = [{transform_indices = @transform_0, window_bounds = array<i64: 16, 32>}, {pipeline_mode = #tpu.pipeline_mode<synchronous>, transform_indices = @transform_1, window_bounds = array<i64: 32, 128>}, {pipeline_mode = #tpu.pipeline_mode<synchronous>, transform_indices = @transform_2, window_bounds = array<i64: 1, 128>}, {pipeline_mode = #tpu.pipeline_mode<synchronous>, transform_indices = @transform_3, window_bounds = array<i64: 1, 128>}, {pipeline_mode = #tpu.pipeline_mode<synchronous>, transform_indices = @transform_4, window_bounds = array<i64: 1, 128>}, {transform_indices = @transform_5, window_bounds = array<i64: 16, 128>}]} {
    %c0 = arith.constant 0 : index
    %c0_0 = arith.constant 0 : index
    %0 = vector.load %arg2[%c0, %c0_0] : memref<32x128xf32, #tpu.memory_space<vmem>>, vector<32x128xf32>
    %c0_1 = arith.constant 0 : index
    %c0_2 = arith.constant 0 : index
    %1 = vector.load %arg1[%c0_1, %c0_2] : memref<16x32xf32, #tpu.memory_space<vmem>>, vector<16x32xf32>
    %cst = arith.constant dense<0.000000e+00> : vector<16x128xf32>
    %2 = tpu.matmul %1, %0, %cst {dimension_numbers = #tpu.dot_dimension_numbers<[1], [0], [0], [1], [0, 0, 1, 1], [], []>} : vector<16x32xf32>, vector<32x128xf32>, vector<16x128xf32> -> vector<16x128xf32>
    %c0_3 = arith.constant 0 : index
    %c0_4 = arith.constant 0 : index
    %3 = vector.load %arg3[%c0_3, %c0_4] : memref<1x128xf32, #tpu.memory_space<vmem>>, vector<1x128xf32>
    %4 = vector.broadcast %3 : vector<1x128xf32> to vector<16x128xf32>
    %5 = arith.addf %2, %4 : vector<16x128xf32>
    %cst_5 = arith.constant 5.000000e-01 : f32
    %6 = vector.broadcast %cst_5 : f32 to vector<16x128xf32>
    %7 = arith.mulf %6, %5 : vector<16x128xf32>
    %cst_6 = arith.constant 0.707106769 : f32
    %8 = vector.broadcast %cst_6 : f32 to vector<16x128xf32>
    %9 = arith.mulf %5, %8 : vector<16x128xf32>
    %10 = math.erf %9 : vector<16x128xf32>
    %cst_7 = arith.constant 1.000000e+00 : f32
    %11 = vector.broadcast %cst_7 : f32 to vector<16x128xf32>
    %12 = arith.addf %11, %10 : vector<16x128xf32>
    %13 = arith.mulf %7, %12 : vector<16x128xf32>
    %cst_8 = arith.constant dense<0.000000e+00> : vector<16xf32>
    %14 = vector.multi_reduction <add>, %13, %cst_8 [1] : vector<16x128xf32> to vector<16xf32>
    %15 = vector.shape_cast %14 : vector<16xf32> to vector<16x1xf32>
    %cst_9 = arith.constant 7.812500e-03 : f32
    %16 = vector.broadcast %cst_9 : f32 to vector<16x1xf32>
    %17 = arith.mulf %15, %16 : vector<16x1xf32>
    %18 = arith.mulf %13, %13 : vector<16x128xf32>
    %cst_10 = arith.constant dense<0.000000e+00> : vector<16xf32>
    %19 = vector.multi_reduction <add>, %18, %cst_10 [1] : vector<16x128xf32> to vector<16xf32>
    %20 = vector.shape_cast %19 : vector<16xf32> to vector<16x1xf32>
    %cst_11 = arith.constant 7.812500e-03 : f32
    %21 = vector.broadcast %cst_11 : f32 to vector<16x1xf32>
    %22 = arith.mulf %20, %21 : vector<16x1xf32>
    %23 = arith.mulf %17, %17 : vector<16x1xf32>
    %24 = arith.subf %22, %23 : vector<16x1xf32>
    %cst_12 = arith.constant 0.000000e+00 : f32
    %25 = vector.broadcast %cst_12 : f32 to vector<16x1xf32>
    %26 = arith.maximumf %24, %25 : vector<16x1xf32>
    %cst_13 = arith.constant 9.99999974E-6 : f32
    %27 = vector.broadcast %cst_13 : f32 to vector<16x1xf32>
    %28 = arith.addf %26, %27 : vector<16x1xf32>
    %29 = math.rsqrt %28 : vector<16x1xf32>
    %30 = vector.broadcast %17 : vector<16x1xf32> to vector<16x128xf32>
    %31 = arith.subf %13, %30 : vector<16x128xf32>
    %32 = vector.broadcast %29 : vector<16x1xf32> to vector<16x128xf32>
    %33 = arith.mulf %31, %32 : vector<16x128xf32>
    %c0_14 = arith.constant 0 : index
    %c0_15 = arith.constant 0 : index
    %34 = vector.load %arg4[%c0_14, %c0_15] : memref<1x128xf32, #tpu.memory_space<vmem>>, vector<1x128xf32>
    %35 = vector.broadcast %34 : vector<1x128xf32> to vector<16x128xf32>
    %36 = arith.mulf %33, %35 : vector<16x128xf32>
    %c0_16 = arith.constant 0 : index
    %c0_17 = arith.constant 0 : index
    %37 = vector.load %arg5[%c0_16, %c0_17] : memref<1x128xf32, #tpu.memory_space<vmem>>, vector<1x128xf32>
    %38 = vector.broadcast %37 : vector<1x128xf32> to vector<16x128xf32>
    %39 = arith.addf %36, %38 : vector<16x128xf32>
    %c0_18 = arith.constant 0 : index
    %c0_19 = arith.constant 0 : index
    %40 = vector.load %arg6[%c0_18, %c0_19] : memref<16x128xf32, #tpu.memory_space<vmem>>, vector<16x128xf32>
    tpu.vector_store %arg6[%c0_18, %c0_19], %39 {strides = array<i32>} : memref<16x128xf32, #tpu.memory_space<vmem>>, vector<16x128xf32>,
    return
  }
  func.func @transform_0(%arg0: i32) -> (i32, i32) {
    %c0_i32 = arith.constant 0 : i32
    %c0_i32_0 = arith.constant 0 : i32
    return %arg0, %c0_i32 : i32, i32
  }
  func.func @transform_1(%arg0: i32) -> (i32, i32) {
    %c0_i32 = arith.constant 0 : i32
    %c0_i32_0 = arith.constant 0 : i32
    %c0_i32_1 = arith.constant 0 : i32
    return %c0_i32, %c0_i32_0 : i32, i32
  }
  func.func @transform_2(%arg0: i32) -> (i32, i32) {
    %c0_i32 = arith.constant 0 : i32
    %c0_i32_0 = arith.constant 0 : i32
    %c0_i32_1 = arith.constant 0 : i32
    return %c0_i32, %c0_i32_0 : i32, i32
  }
  func.func @transform_3(%arg0: i32) -> (i32, i32) {
    %c0_i32 = arith.constant 0 : i32
    %c0_i32_0 = arith.constant 0 : i32
    %c0_i32_1 = arith.constant 0 : i32
    return %c0_i32, %c0_i32_0 : i32, i32
  }
  func.func @transform_4(%arg0: i32) -> (i32, i32) {
    %c0_i32 = arith.constant 0 : i32
    %c0_i32_0 = arith.constant 0 : i32
    %c0_i32_1 = arith.constant 0 : i32
    return %c0_i32, %c0_i32_0 : i32, i32
  }
  func.func @transform_5(%arg0: i32) -> (i32, i32) {
    %c0_i32 = arith.constant 0 : i32
    %c0_i32_0 = arith.constant 0 : i32
    return %arg0, %c0_i32 : i32, i32
  }
}

</mosaic_0001>

<llo_original>
// kernel: tpu_custom_call.1
$region0: #{tpu_custom_call.1}
  #allocation0 [shape = 'u32[]', space=smem, size = 0x4, offset = 0x4, fixed_abs, tag = 'smem constant byte address 0x4 - core index']
  #allocation1 [shape = 'u32[144,128]{1,0:T(1,128)}', space=vmem, size = 0x12000, scoped, tag = 'internal scratch']
  %s0 = inlined_call_operand.hbm [shape: f32[16,32], index: 0, kind: input, shape index: {}]
  %s1 = inlined_call_operand.hbm [shape: f32[32,128], index: 1, kind: input, shape index: {}]
  %s2 = inlined_call_operand.vmem [shape: f32[1,128], index: 2, kind: input, shape index: {}]
  %s3 = inlined_call_operand.vmem [shape: f32[1,128], index: 3, kind: input, shape index: {}]
  %s4 = inlined_call_operand.vmem [shape: f32[1,128], index: 4, kind: input, shape index: {}]
  %s5 = inlined_call_operand.hbm [shape: f32[16,128], index: 5, kind: output, shape index: {}]
  %s6 = sld [smem:[#allocation0]]
  $region38: #{tpu_custom_call.1} parent=0
    _
  %s8 = ssub.s32 1, %s6
  %s9 = scalar_select 0, %s8, %s6
  $region1: #{tpu_custom_call.1} parent=0
    #allocation2 [shape = 'u8[8192]{0}', space=vmem, size = 0x2000, scoped, tag = 'input window, operand 0, single buffered']
    #allocation3 [shape = 's32[1]{0}', space=sflag, size = 0x4, scoped, tag = 'scoped memory for tpu_custom_call.1']
    #allocation4 [shape = 's32[1]{0}', space=sflag, size = 0x4, scoped, tag = 'scoped memory for tpu_custom_call.1']
    #allocation5 [shape = 'u8[16384]{0}', space=vmem, size = 0x4000, scoped, tag = 'input window, operand 1, single buffered']
    #allocation6 [shape = 's32[1]{0}', space=sflag, size = 0x4, scoped, tag = 'scoped memory for tpu_custom_call.1']
    #allocation7 [shape = 'u8[8192]{0}', space=vmem, size = 0x2000, scoped, tag = 'output window, operand 0, single buffered']
    %10 = vsyncpa [#allocation3], 0
    %11 = vsyncpa [#allocation6], 0
    %12 = vsyncpa [#allocation4], 0
    // Predicated region
    $region2: #{tpu_custom_call.1} parent=1 // pred_check
      _
    $region3: #{tpu_custom_call.1} parent=1 // pred_check_branch
      %14 = sbr.rel (0) target = $region5
    $region4: #{tpu_custom_call.1} parent=1 // pred_region
      %s16 = ssub.s32 256, 256
      %17 = vsyncadd [#allocation3], %s16
      %s18 = sshll.u32 [#allocation2], 4
      %s19 = int_to_ptr.vmem [resolvable:$true] %s18
      %24 = dma.hbm_to_vmem [thread:$0]  %s0, 256, %s19, [#allocation3], 128, 128, 8
    $region5: #{tpu_custom_call.1} parent=1 // pred_fallthru
      _
    // Predicated region
    $region6: #{tpu_custom_call.1} parent=1 // pred_check
      _
    $region7: #{tpu_custom_call.1} parent=1 // pred_check_branch
      %26 = sbr.rel (0) target = $region9
    $region8: #{tpu_custom_call.1} parent=1 // pred_region
      %s28 = ssub.s32 512, 512
      %29 = vsyncadd [#allocation6], %s28
      %s30 = sshll.u32 [#allocation5], 4
      %s31 = int_to_ptr.vmem [resolvable:$true] %s30
      %36 = dma.hbm_to_vmem [thread:$0]  %s1, 512, %s31, [#allocation6], 128, 128, 8
    $region9: #{tpu_custom_call.1} parent=1 // pred_fallthru
      _
    // Predicated region
    $region10: #{tpu_custom_call.1} parent=1 // pred_check
      _
    $region11: #{tpu_custom_call.1} parent=1 // pred_check_branch
      %38 = sbr.rel (0) target = $region13
    $region12: #{tpu_custom_call.1} parent=1 // pred_region
      _
    $region13: #{tpu_custom_call.1} parent=1 // pred_fallthru
      _
    // Predicated region
    $region14: #{tpu_custom_call.1} parent=1 // pred_check
      _
    $region15: #{tpu_custom_call.1} parent=1 // pred_check_branch
      %40 = sbr.rel (0) target = $region17
    $region16: #{tpu_custom_call.1} parent=1 // pred_region
      _
    $region17: #{tpu_custom_call.1} parent=1 // pred_fallthru
      _
    // Predicated region
    $region18: #{tpu_custom_call.1} parent=1 // pred_check
      _
    $region19: #{tpu_custom_call.1} parent=1 // pred_check_branch
      %42 = sbr.rel (0) target = $region21
    $region20: #{tpu_custom_call.1} parent=1 // pred_region
      _
    $region21: #{tpu_custom_call.1} parent=1 // pred_fallthru
      _
    // Predicated region
    $region22: #{tpu_custom_call.1} parent=1 // pred_check
      _
    $region23: #{tpu_custom_call.1} parent=1 // pred_check_branch
      %44 = sbr.rel (0) target = $region25
    $region24: #{tpu_custom_call.1} parent=1 // pred_region
      %45 = dma.done [#allocation3], 256
    $region25: #{tpu_custom_call.1} parent=1 // pred_fallthru
      _
    // Predicated region
    $region26: #{tpu_custom_call.1} parent=1 // pred_check
      _
    $region27: #{tpu_custom_call.1} parent=1 // pred_check_branch
      %47 = sbr.rel (0) target = $region29
    $region28: #{tpu_custom_call.1} parent=1 // pred_region
      %48 = dma.done [#allocation6], 512
    $region29: #{tpu_custom_call.1} parent=1 // pred_fallthru
      _
    %v49 = vld [vmem:[#allocation5] sm:$0xff]
    %v50 = vld [vmem:[#allocation5 + $0x8] sm:$0xff]
    %v51 = vld [vmem:[#allocation5 + $0x10] sm:$0xff]
    %v52 = vld [vmem:[#allocation5 + $0x18] sm:$0xff]
    %v53 = vld [vmem:[#allocation2] sm:$0xff]
    %v54 = vld [vmem:[#allocation2 + $0x8] sm:$0xff]
    %v55 = vld [vmem:[%s2] sm:$0x1]
    %v57 = vlaneseq
    %v58 = vshrl.u32 %v57, 7
    %v59 = vsub.s32 0, %v58
    %v60 = vrot.slane %v55, %v59
    %vm62 = vcmask 261120
    %v64 = vsel %vm62, %v53, 0
    %v67 = vsel %vm62, %v54, 0
    %69 = vmatprep.subr.mxu0 0.0
    %70 = vmatpush1.msra.mxu0 0.0
    %71 = vmatprep.subr.mxu0 0.0
    %72 = vmatpush1.msra.mxu0 0.0
    %73 = vmatprep.subr.mxu0 0.0
    %74 = vmatpush1.msra.mxu0 0.0
    %75 = vmatprep.subr.mxu0 0.0
    %76 = vmatpush1.msra.mxu0 0.0
    %77 = vmatprep.subr.mxu0 0.0
    %78 = vmatpush1.msra.mxu0 0.0
    %79 = vmatprep.subr.mxu0 0.0
    %80 = vmatpush1.msra.mxu0 0.0
    %81 = vmatprep.subr.mxu0 0.0
    %82 = vmatpush1.msra.mxu0 0.0
    %83 = vmatprep.subr.mxu0 0.0
    %84 = vmatpush1.msra.mxu0 0.0
    %85 = vmatprep.subr.mxu0 0.0
    %86 = vmatpush1.msra.mxu0 0.0
    %87 = vmatprep.subr.mxu0 0.0
    %88 = vmatpush1.msra.mxu0 0.0
    %89 = vmatprep.subr.mxu0 0.0
    %90 = vmatpush1.msra.mxu0 0.0
    %91 = vmatprep.subr.mxu0 0.0
    %92 = vmatpush1.msra.mxu0 0.0
    %93 = vmatprep.subr.mxu0 0.0
    %94 = vmatpush1.msra.mxu0 %v52
    %95 = vmatprep.subr.mxu0 0.0
    %96 = vmatpush1.msra.mxu0 %v51
    %97 = vmatprep.subr.mxu0 0.0
    %98 = vmatpush1.msra.mxu0 %v50
    %99 = vmatprep.subr.mxu0 0.0
    %100 = vmatpush1.msra.mxu0 %v49
    %101 = vmatprep.subr.mxu0 0.0
    %102 = vmatpush2.msra.mxu0 0.0
    %103 = vmatprep.subr.mxu0 0.0
    %104 = vmatpush2.msra.mxu0 0.0
    %105 = vmatprep.subr.mxu0 0.0
    %106 = vmatpush2.msra.mxu0 0.0
    %107 = vmatprep.subr.mxu0 0.0
    %108 = vmatpush2.msra.mxu0 0.0
    %109 = vmatprep.subr.mxu0 0.0
    %110 = vmatpush2.msra.mxu0 0.0
    %111 = vmatprep.subr.mxu0 0.0
    %112 = vmatpush2.msra.mxu0 0.0
    %113 = vmatprep.subr.mxu0 0.0
    %114 = vmatpush2.msra.mxu0 0.0
    %115 = vmatprep.subr.mxu0 0.0
    %116 = vmatpush2.msra.mxu0 0.0
    %117 = vmatprep.subr.mxu0 0.0
    %118 = vmatpush2.msra.mxu0 0.0
    %119 = vmatprep.subr.mxu0 0.0
    %120 = vmatpush2.msra.mxu0 0.0
    %121 = vmatprep.subr.mxu0 0.0
    %122 = vmatpush2.msra.mxu0 0.0
    %123 = vmatprep.subr.mxu0 0.0
    %124 = vmatpush2.msra.mxu0 0.0
    %125 = vmatprep.subr.mxu0 0.0
    %126 = vmatpush2.msra.mxu0 0.0
    %127 = vmatprep.subr.mxu0 0.0
    %128 = vmatpush2.msra.mxu0 0.0
    %129 = vmatprep.subr.mxu0 0.0
    %130 = vmatpush2.msra.mxu0 0.0
    %131 = vmatprep.subr.mxu0 0.0
    %132 = vmatpush2.msra.mxu0 0.0
    %133 = vmatprep.mubr.f32.mxu0 0.0
    %134 = vmatmul.mubr.f32.gmra.mxu0 %v64
    %v135 = vpop.f32.mrf.mxu0
    %v136 = vadd.f32 %v60, %v135
    %v137 = vpop.f32.mrf.mxu0
    %138 = vmatprep.mubr.f32.mxu0 0.0
    %139 = vmatmul.mubr.f32.gmra.mxu0 %v67
    %v140 = vpop.f32.mrf.mxu0
    %v141 = vadd.f32 %v60, %v140
    %v142 = vpop.f32.mrf.mxu0
    %143 = vdwg.mxu0
    %v144 = vmul.f32 %v136, 0.5
    %v145 = vmul.f32 %v141, 0.5
    %v146 = vmul.f32 %v136, 0.70710677
    %v147 = vmul.f32 %v141, 0.70710677
    %v148 = verf.f32.pop %v146
    %v149 = verf.f32.pop %v147
    %v150 = vadd.f32 %v148, 1.0
    %v151 = vadd.f32 %v149, 1.0
    %v152 = vmul.f32 %v144, %v150
    %v153 = vmul.f32 %v145, %v151
    %154 = vadd.xlane.f32.xlu0 %v152
    %v155 = vpop.xlane.xlu0 %154
    %156 = vadd.xlane.f32.xlu0 %v153
    %v157 = vpop.xlane.xlu0 %156
    %v158 = vmul.f32 %v155, 0.0078125
    %v159 = vmul.f32 %v157, 0.0078125
    %v160 = vmul.f32 %v152, %v152
    %v161 = vmul.f32 %v153, %v153
    %162 = vadd.xlane.f32.xlu0 %v160
    %v163 = vpop.xlane.xlu0 %162
    %164 = vadd.xlane.f32.xlu0 %v161
    %v165 = vpop.xlane.xlu0 %164
    %v166 = vmul.f32 %v163, 0.0078125
    %v167 = vmul.f32 %v165, 0.0078125
    %v168 = vmul.f32 %v158, %v158
    %v169 = vmul.f32 %v159, %v159
    %v170 = vsub.f32 %v166, %v168
    %v171 = vsub.f32 %v167, %v169
    %v172 = vmax.f32 %v170, 0.0
    %v173 = vmax.f32 %v171, 0.0
    %v174 = vadd.f32 %v172, 1e-05
    %v175 = vadd.f32 %v173, 1e-05
    %v176 = vrsqrt.pop %v174
    %v177 = vrsqrt.pop %v175
    %v178 = vsub.f32 %v152, %v158
    %v179 = vsub.f32 %v153, %v159
    %v180 = vmul.f32 %v178, %v176
    %v181 = vmul.f32 %v179, %v177
    %v182 = vld [vmem:[%s3] sm:$0x1]
    %v184 = vlaneseq
    %v185 = vshrl.u32 %v184, 7
    %v186 = vsub.s32 0, %v185
    %v187 = vrot.slane %v182, %v186
    %v189 = vmul.f32 %v180, %v187
    %v190 = vmul.f32 %v181, %v187
    %v191 = vld [vmem:[%s4] sm:$0x1]
    %v193 = vlaneseq
    %v194 = vshrl.u32 %v193, 7
    %v195 = vsub.s32 0, %v194
    %v196 = vrot.slane %v191, %v195
    %v198 = vadd.f32 %v189, %v196
    %v199 = vadd.f32 %v190, %v196
    %200 = vst [vmem:[#allocation7] sm:$0xff] %v198
    %201 = vst [vmem:[#allocation7 + $0x8] sm:$0xff] %v199
    // Predicated region
    $region30: #{tpu_custom_call.1} parent=1 // pred_check
      _
    $region31: #{tpu_custom_call.1} parent=1 // pred_check_branch
      %203 = sbr.rel (0) target = $region33
    $region32: #{tpu_custom_call.1} parent=1 // pred_region
      %s205 = ssub.s32 256, 256
      %206 = vsyncadd [#allocation4], %s205
      %s207 = sshll.u32 [#allocation7], 4
      %s208 = int_to_ptr.vmem [resolvable:$true] %s207
      %213 = dma.vmem_to_hbm [thread:$0]  %s208, 256, %s5, [#allocation4], 128, 128, 8
    $region33: #{tpu_custom_call.1} parent=1 // pred_fallthru
      _
    // Predicated region
    $region34: #{tpu_custom_call.1} parent=1 // pred_check
      _
    $region35: #{tpu_custom_call.1} parent=1 // pred_check_branch
      %215 = sbr.rel (0) target = $region37
    $region36: #{tpu_custom_call.1} parent=1 // pred_region
      %216 = dma.done [#allocation4], 256
    $region37: #{tpu_custom_call.1} parent=1 // pred_fallthru
      _
    %217 = vsyncpa [#allocation3], 1
    %218 = vsyncpa [#allocation6], 1
    %219 = vsyncpa [#allocation4], 1

// kernel: tpu_custom_call.1
$region0: #{tpu_custom_call.1}
  #allocation0 [shape = 'u32[]', space=smem, size = 0x4, offset = 0x4, fixed_abs, tag = 'smem constant byte address 0x4 - core index']
  #allocation1 [shape = 'u32[144,128]{1,0:T(1,128)}', space=vmem, size = 0x12000, scoped, tag = 'internal scratch']
  %s0 = inlined_call_operand.hbm [shape: f32[16,32], index: 0, kind: input, shape index: {}]
  %s1 = inlined_call_operand.hbm [shape: f32[32,128], index: 1, kind: input, shape index: {}]
  %s2 = inlined_call_operand.vmem [shape: f32[1,128], index: 2, kind: input, shape index: {}]
  %s3 = inlined_call_operand.vmem [shape: f32[1,128], index: 3, kind: input, shape index: {}]
  %s4 = inlined_call_operand.vmem [shape: f32[1,128], index: 4, kind: input, shape index: {}]
  %s5 = inlined_call_operand.hbm [shape: f32[16,128], index: 5, kind: output, shape index: {}]
  %s6 = sld [smem:[#allocation0]]
  $region38: #{tpu_custom_call.1} parent=0
    _
  %s8 = ssub.s32 1, %s6
  %s9 = scalar_select 0, %s8, %s6
  $region1: #{tpu_custom_call.1} parent=0
    #allocation2 [shape = 'u8[8192]{0}', space=vmem, size = 0x2000, scoped, tag = 'input window, operand 0, single buffered']
    #allocation3 [shape = 's32[1]{0}', space=sflag, size = 0x4, scoped, tag = 'scoped memory for tpu_custom_call.1']
    #allocation4 [shape = 's32[1]{0}', space=sflag, size = 0x4, scoped, tag = 'scoped memory for tpu_custom_call.1']
    #allocation5 [shape = 'u8[16384]{0}', space=vmem, size = 0x4000, scoped, tag = 'input window, operand 1, single buffered']
    #allocation6 [shape = 's32[1]{0}', space=sflag, size = 0x4, scoped, tag = 'scoped memory for tpu_custom_call.1']
    #allocation7 [shape = 'u8[8192]{0}', space=vmem, size = 0x2000, scoped, tag = 'output window, operand 0, single buffered']
    %10 = vsyncpa [#allocation3], 0
    %11 = vsyncpa [#allocation6], 0
    %12 = vsyncpa [#allocation4], 0
    // Predicated region
    $region2: #{tpu_custom_call.1} parent=1 // pred_check
      _
    $region3: #{tpu_custom_call.1} parent=1 // pred_check_branch
      %14 = sbr.rel (0) target = $region5
    $region4: #{tpu_custom_call.1} parent=1 // pred_region
      %s16 = ssub.s32 256, 256
      %17 = vsyncadd [#allocation3], %s16
      %s18 = sshll.u32 [#allocation2], 4
      %s19 = int_to_ptr.vmem [resolvable:$true] %s18
      %24 = dma.hbm_to_vmem [thread:$0]  %s0, 256, %s19, [#allocation3], 128, 128, 8
    $region5: #{tpu_custom_call.1} parent=1 // pred_fallthru
      _
    // Predicated region
    $region6: #{tpu_custom_call.1} parent=1 // pred_check
      _
    $region7: #{tpu_custom_call.1} parent=1 // pred_check_branch
      %26 = sbr.rel (0) target = $region9
    $region8: #{tpu_custom_call.1} parent=1 // pred_region
      %s28 = ssub.s32 512, 512
      %29 = vsyncadd [#allocation6], %s28
      %s30 = sshll.u32 [#allocation5], 4
      %s31 = int_to_ptr.vmem [resolvable:$true] %s30
      %36 = dma.hbm_to_vmem [thread:$0]  %s1, 512, %s31, [#allocation6], 128, 128, 8
    $region9: #{tpu_custom_call.1} parent=1 // pred_fallthru
      _
    // Predicated region
    $region10: #{tpu_custom_call.1} parent=1 // pred_check
      _
    $region11: #{tpu_custom_call.1} parent=1 // pred_check_branch
      %38 = sbr.rel (0) target = $region13
    $region12: #{tpu_custom_call.1} parent=1 // pred_region
      _
    $region13: #{tpu_custom_call.1} parent=1 // pred_fallthru
      _
    // Predicated region
    $region14: #{tpu_custom_call.1} parent=1 // pred_check
      _
    $region15: #{tpu_custom_call.1} parent=1 // pred_check_branch
      %40 = sbr.rel (0) target = $region17
    $region16: #{tpu_custom_call.1} parent=1 // pred_region
      _
    $region17: #{tpu_custom_call.1} parent=1 // pred_fallthru
      _
    // Predicated region
    $region18: #{tpu_custom_call.1} parent=1 // pred_check
      _
    $region19: #{tpu_custom_call.1} parent=1 // pred_check_branch
      %42 = sbr.rel (0) target = $region21
    $region20: #{tpu_custom_call.1} parent=1 // pred_region
      _
    $region21: #{tpu_custom_call.1} parent=1 // pred_fallthru
      _
    // Predicated region
    $region22: #{tpu_custom_call.1} parent=1 // pred_check
      _
    $region23: #{tpu_custom_call.1} parent=1 // pred_check_branch
      %44 = sbr.rel (0) target = $region25
    $region24: #{tpu_custom_call.1} parent=1 // pred_region
      %45 = dma.done [#allocation3], 256
    $region25: #{tpu_custom_call.1} parent=1 // pred_fallthru
      _
    // Predicated region
    $region26: #{tpu_custom_call.1} parent=1 // pred_check
      _
    $region27: #{tpu_custom_call.1} parent=1 // pred_check_branch
      %47 = sbr.rel (0) target = $region29
    $region28: #{tpu_custom_call.1} parent=1 // pred_region
      %48 = dma.done [#allocation6], 512
    $region29: #{tpu_custom_call.1} parent=1 // pred_fallthru
      _
    %v49 = vld [vmem:[#allocation5] sm:$0xff]
    %v50 = vld [vmem:[#allocation5 + $0x8] sm:$0xff]
    %v51 = vld [vmem:[#allocation5 + $0x10] sm:$0xff]
    %v52 = vld [vmem:[#allocation5 + $0x18] sm:$0xff]
    %v53 = vld [vmem:[#allocation2] sm:$0xff]
    %v54 = vld [vmem:[#allocation2 + $0x8] sm:$0xff]
    %v55 = vld [vmem:[%s2] sm:$0x1]
    %v57 = vlaneseq
    %v58 = vshrl.u32 %v57, 7
    %v59 = vsub.s32 0, %v58
    %v60 = vrot.slane %v55, %v59
    %vm62 = vcmask 261120
    %v64 = vsel %vm62, %v53, 0
    %v67 = vsel %vm62, %v54, 0
    %69 = vmatprep.subr.mxu0 0.0
    %70 = vmatpush1.msra.mxu0 0.0
    %71 = vmatprep.subr.mxu0 0.0
    %72 = vmatpush1.msra.mxu0 0.0
    %73 = vmatprep.subr.mxu0 0.0
    %74 = vmatpush1.msra.mxu0 0.0
    %75 = vmatprep.subr.mxu0 0.0
    %76 = vmatpush1.msra.mxu0 0.0
    %77 = vmatprep.subr.mxu0 0.0
    %78 = vmatpush1.msra.mxu0 0.0
    %79 = vmatprep.subr.mxu0 0.0
    %80 = vmatpush1.msra.mxu0 0.0
    %81 = vmatprep.subr.mxu0 0.0
    %82 = vmatpush1.msra.mxu0 0.0
    %83 = vmatprep.subr.mxu0 0.0
    %84 = vmatpush1.msra.mxu0 0.0
    %85 = vmatprep.subr.mxu0 0.0
    %86 = vmatpush1.msra.mxu0 0.0
    %87 = vmatprep.subr.mxu0 0.0
    %88 = vmatpush1.msra.mxu0 0.0
    %89 = vmatprep.subr.mxu0 0.0
    %90 = vmatpush1.msra.mxu0 0.0
    %91 = vmatprep.subr.mxu0 0.0
    %92 = vmatpush1.msra.mxu0 0.0
    %93 = vmatprep.subr.mxu0 0.0
    %94 = vmatpush1.msra.mxu0 %v52
    %95 = vmatprep.subr.mxu0 0.0
    %96 = vmatpush1.msra.mxu0 %v51
    %97 = vmatprep.subr.mxu0 0.0
    %98 = vmatpush1.msra.mxu0 %v50
    %99 = vmatprep.subr.mxu0 0.0
    %100 = vmatpush1.msra.mxu0 %v49
    %101 = vmatprep.subr.mxu0 0.0
    %102 = vmatpush2.msra.mxu0 0.0
    %103 = vmatprep.subr.mxu0 0.0
    %104 = vmatpush2.msra.mxu0 0.0
    %105 = vmatprep.subr.mxu0 0.0
    %106 = vmatpush2.msra.mxu0 0.0
    %107 = vmatprep.subr.mxu0 0.0
    %108 = vmatpush2.msra.mxu0 0.0
    %109 = vmatprep.subr.mxu0 0.0
    %110 = vmatpush2.msra.mxu0 0.0
    %111 = vmatprep.subr.mxu0 0.0
    %112 = vmatpush2.msra.mxu0 0.0
    %113 = vmatprep.subr.mxu0 0.0
    %114 = vmatpush2.msra.mxu0 0.0
    %115 = vmatprep.subr.mxu0 0.0
    %116 = vmatpush2.msra.mxu0 0.0
    %117 = vmatprep.subr.mxu0 0.0
    %118 = vmatpush2.msra.mxu0 0.0
    %119 = vmatprep.subr.mxu0 0.0
    %120 = vmatpush2.msra.mxu0 0.0
    %121 = vmatprep.subr.mxu0 0.0
    %122 = vmatpush2.msra.mxu0 0.0
    %123 = vmatprep.subr.mxu0 0.0
    %124 = vmatpush2.msra.mxu0 0.0
    %125 = vmatprep.subr.mxu0 0.0
    %126 = vmatpush2.msra.mxu0 0.0
    %127 = vmatprep.subr.mxu0 0.0
    %128 = vmatpush2.msra.mxu0 0.0
    %129 = vmatprep.subr.mxu0 0.0
    %130 = vmatpush2.msra.mxu0 0.0
    %131 = vmatprep.subr.mxu0 0.0
    %132 = vmatpush2.msra.mxu0 0.0
    %133 = vmatprep.mubr.f32.mxu0 0.0
    %134 = vmatmul.mubr.f32.gmra.mxu0 %v64
    %v135 = vpop.f32.mrf.mxu0
    %v136 = vadd.f32 %v60, %v135
    %v137 = vpop.f32.mrf.mxu0
    %138 = vmatprep.mubr.f32.mxu0 0.0
    %139 = vmatmul.mubr.f32.gmra.mxu0 %v67
    %v140 = vpop.f32.mrf.mxu0
    %v141 = vadd.f32 %v60, %v140
    %v142 = vpop.f32.mrf.mxu0
    %143 = vdwg.mxu0
    %v144 = vmul.f32 %v136, 0.5
    %v145 = vmul.f32 %v141, 0.5
    %v146 = vmul.f32 %v136, 0.70710677
    %v147 = vmul.f32 %v141, 0.70710677
    %v148 = verf.f32.pop %v146
    %v149 = verf.f32.pop %v147
    %v150 = vadd.f32 %v148, 1.0
    %v151 = vadd.f32 %v149, 1.0
    %v152 = vmul.f32 %v144, %v150
    %v153 = vmul.f32 %v145, %v151
    %154 = vadd.xlane.f32.xlu0 %v152
    %v155 = vpop.xlane.xlu0 %154
    %156 = vadd.xlane.f32.xlu0 %v153
    %v157 = vpop.xlane.xlu0 %156
    %v158 = vmul.f32 %v155, 0.0078125
    %v159 = vmul.f32 %v157, 0.0078125
    %v160 = vmul.f32 %v152, %v152
    %v161 = vmul.f32 %v153, %v153
    %162 = vadd.xlane.f32.xlu0 %v160
    %v163 = vpop.xlane.xlu0 %162
    %164 = vadd.xlane.f32.xlu0 %v161
    %v165 = vpop.xlane.xlu0 %164
    %v166 = vmul.f32 %v163, 0.0078125
    %v167 = vmul.f32 %v165, 0.0078125
    %v168 = vmul.f32 %v158, %v158
    %v169 = vmul.f32 %v159, %v159
    %v170 = vsub.f32 %v166, %v168
    %v171 = vsub.f32 %v167, %v169
    %v172 = vmax.f32 %v170, 0.0
    %v173 = vmax.f32 %v171, 0.0
    %v174 = vadd.f32 %v172, 1e-05
    %v175 = vadd.f32 %v173, 1e-05
    %v176 = vrsqrt.pop %v174
    %v177 = vrsqrt.pop %v175
    %v178 = vsub.f32 %v152, %v158
    %v179 = vsub.f32 %v153, %v159
    %v180 = vmul.f32 %v178, %v176
    %v181 = vmul.f32 %v179, %v177
    %v182 = vld [vmem:[%s3] sm:$0x1]
    %v184 = vlaneseq
    %v185 = vshrl.u32 %v184, 7
    %v186 = vsub.s32 0, %v185
    %v187 = vrot.slane %v182, %v186
    %v189 = vmul.f32 %v180, %v187
    %v190 = vmul.f32 %v181, %v187
    %v191 = vld [vmem:[%s4] sm:$0x1]
    %v193 = vlaneseq
    %v194 = vshrl.u32 %v193, 7
    %v195 = vsub.s32 0, %v194
    %v196 = vrot.slane %v191, %v195
    %v198 = vadd.f32 %v189, %v196
    %v199 = vadd.f32 %v190, %v196
    %200 = vst [vmem:[#allocation7] sm:$0xff] %v198
    %201 = vst [vmem:[#allocation7 + $0x8] sm:$0xff] %v199
    // Predicated region
    $region30: #{tpu_custom_call.1} parent=1 // pred_check
      _
    $region31: #{tpu_custom_call.1} parent=1 // pred_check_branch
      %203 = sbr.rel (0) target = $region33
    $region32: #{tpu_custom_call.1} parent=1 // pred_region
      %s205 = ssub.s32 256, 256
      %206 = vsyncadd [#allocation4], %s205
      %s207 = sshll.u32 [#allocation7], 4
      %s208 = int_to_ptr.vmem [resolvable:$true] %s207
      %213 = dma.vmem_to_hbm [thread:$0]  %s208, 256, %s5, [#allocation4], 128, 128, 8
    $region33: #{tpu_custom_call.1} parent=1 // pred_fallthru
      _
    // Predicated region
    $region34: #{tpu_custom_call.1} parent=1 // pred_check
      _
    $region35: #{tpu_custom_call.1} parent=1 // pred_check_branch
      %215 = sbr.rel (0) target = $region37
    $region36: #{tpu_custom_call.1} parent=1 // pred_region
      %216 = dma.done [#allocation4], 256
    $region37: #{tpu_custom_call.1} parent=1 // pred_fallthru
      _
    %217 = vsyncpa [#allocation3], 1
    %218 = vsyncpa [#allocation6], 1
    %219 = vsyncpa [#allocation4], 1

</llo_original>
